<compile_context>
chip_gen: v6e
topology: v6e:2x2x1
jax: 0.10.0
libtpu: 0.0.40
codegen_flags: <defaults>
</compile_context>

<pallas_src>
import numpy as np
import jax
import jax.numpy as jnp
from jax.experimental import pallas as pl
from jax.experimental.pallas import tpu as pltpu

EPS = 1e-5          # torch.nn.BatchNorm1d default eps
NEG_SLOPE = 0.01    # torch.nn.LeakyReLU default negative_slope
LANE = 128          # TPU vreg lane width


# ----------------------------- kernel ---------------------------------------


def _make_mlp_kernel(n_layers, bf16_act):
    """Kernel over refs: (x, w0, b0, w1, b1, ..., w_{L-1}, b_{L-1}, out)."""

    def kernel(*refs):
        x_ref, *param_refs, o_ref = refs
        h = x_ref[...]                                    # bf16 tile (TB, D0)
        for li in range(n_layers):
            w_ref = param_refs[2 * li]                    # bf16 (Din, Dout), BN folded
            b_ref = param_refs[2 * li + 1]                # f32  (1, Dout)
            h = jnp.dot(h, w_ref[...],
                        preferred_element_type=jnp.float32) + b_ref[...]
            if li + 1 < n_layers:
                if bf16_act:
                    # v6e/v7x: bf16 VPU path, single vmax per vreg pair
                    h = h.astype(jnp.bfloat16)
                    h = jnp.maximum(h, h * jnp.bfloat16(NEG_SLOPE))
                else:
                    # v5e: no bf16 VALU -> keep elementwise math in f32
                    h = jnp.maximum(h, h * NEG_SLOPE)
                    h = h.astype(jnp.bfloat16)
            # final layer: Identity activation; Dropout == identity in eval mode
        o_ref[...] = h.astype(o_ref.dtype)

    return kernel


# --------------------------- parameters -------------------------------------


def make_mlp_params(key, input_dim, dims, output_dim, dtype=jnp.float32):
    """Deterministic xavier_uniform weights, zero biases, default BN params.

    Weights are stored transposed vs torch ([in, out]) so the kernel computes
    y = x @ W + b directly on the MXU.
    """
    all_dims = [input_dim] + list(dims) + [output_dim]
    params = []
    for i in range(len(all_dims) - 1):
        fan_in, fan_out = all_dims[i], all_dims[i + 1]
        key, sub = jax.random.split(key)
        bound = (6.0 / (fan_in + fan_out)) ** 0.5
        w = jax.random.uniform(sub, (fan_in, fan_out), dtype, -bound, bound)
        b = jnp.zeros((fan_out,), dtype)
        layer = {"w": w, "b": b}
        if i + 1 < len(all_dims) - 1:       # hidden layers also have BatchNorm1d
            layer["gamma"] = jnp.ones((fan_out,), dtype)
            layer["beta"] = jnp.zeros((fan_out,), dtype)
            layer["running_mean"] = jnp.zeros((fan_out,), dtype)
            layer["running_var"] = jnp.ones((fan_out,), dtype)
        params.append(layer)
    return params


def fold_bn(params):
    """Fold eval-mode BatchNorm1d into the preceding Linear (exact in eval)."""
    folded = []
    for layer in params:
        w, b = layer["w"], layer["b"]
        if "gamma" in layer:
            s = layer["gamma"] * jax.lax.rsqrt(layer["running_var"] + EPS)
            w = w * s[None, :]
            b = (b - layer["running_mean"]) * s + layer["beta"]
        folded.append((w, b))
    return folded


# ----------------------------- wrapper ---------------------------------------


def _round_up(n, m):
    return (n + m - 1) // m * m


def _pad2d(a, rows, cols):
    r, c = a.shape
    return jnp.pad(a, ((0, rows - r), (0, cols - c)))


def _bf16_vpu_available():
    """bf16 elementwise path only on v6e / v7x (v5e has no bf16 VALU)."""
    try:
        kind = jax.devices()[0].device_kind.lower()
    except Exception:
        return False
    return ("v6" in kind) or ("v7" in kind)


def _choose_batch_tiling(batch, max_tile_b):
    """Pick (padded_batch, tile_b): tile a multiple of 128, and >=2 grid steps
    so v7x's two TensorCores both get work via the 'parallel' grid axis."""
    pbatch = _round_up(batch, 2 * LANE)          # multiple of 256 -> pbatch//2 % 128 == 0
    if pbatch // 2 <= max_tile_b:
        return pbatch, pbatch // 2               # exactly 2 grid steps
    pbatch = _round_up(batch, max_tile_b)
    return pbatch, max_tile_b


def build_mlp_forward(params, *, max_tile_b=512, out_dtype=jnp.float32):
    """One-time parameter prep (BN fold, pad, bf16 cast) + jitted forward fn.

    Returns (forward, bf16_act). forward(x: f32[B, in_dim]) -> out_dtype[B, out_dim].
    """
    assert max_tile_b % 256 == 0, "max_tile_b must be a multiple of 256"

    folded = fold_bn(params)
    n_layers = len(folded)
    in_dim = folded[0][0].shape[0]
    out_dim = folded[-1][0].shape[1]

    # Lane-dense padded feature dims (zero-padding is exact: padded input cols
    # are zero and padded weight rows/cols are zero).
    pdims = [_round_up(d, LANE) for d in [in_dim] + [w.shape[1] for w, _ in folded]]

    # One-time: pad + cast folded params (held on device, reused every call).
    flat_params = []
    for li, (w, b) in enumerate(folded):
        wp = _pad2d(w, pdims[li], pdims[li + 1]).astype(jnp.bfloat16)
        bp = jnp.pad(b, (0, pdims[li + 1] - b.shape[0])).reshape(1, -1).astype(jnp.float32)
        flat_params += [wp, bp]

    bf16_act = _bf16_vpu_available()
    kernel = _make_mlp_kernel(n_layers, bf16_act)

    # Resident-weight VMEM budget (Pallas double-buffers every input by default).
    weight_bytes = 2 * sum(pdims[i] * pdims[i + 1] * 2 for i in range(n_layers))
    bias_bytes = 2 * sum(pdims[1:]) * 4
    out_itemsize = np.dtype(out_dtype).itemsize

    @jax.jit
    def forward(x):
        batch, xd = x.shape
        assert xd == in_dim, f"expected input dim {in_dim}, got {xd}"
        pbatch, tile_b = _choose_batch_tiling(batch, max_tile_b)

        x_p = jnp.pad(x, ((0, pbatch - batch),
                          (0, pdims[0] - xd))).astype(jnp.bfloat16)

        # x / out tiles move per grid step; weights/biases use a constant block
        # index so they stay resident in VMEM across the whole grid.
        in_specs = [pl.BlockSpec((tile_b, pdims[0]), lambda i: (i, 0))]
        for li in range(n_layers):
            in_specs.append(pl.BlockSpec((pdims[li], pdims[li + 1]), lambda i: (0, 0)))
            in_specs.append(pl.BlockSpec((1, pdims[li + 1]), lambda i: (0, 0)))
        out_spec = pl.BlockSpec((tile_b, pdims[-1]), lambda i: (i, 0))

        # VMEM budget check: only raise the scoped limit if the resident plan
        # needs it (v7x: 64 MiB physical, 32 MiB default scoped limit).
        io_bytes = 2 * tile_b * (pdims[0] * 2 + pdims[-1] * out_itemsize)
        budget = weight_bytes + bias_bytes + io_bytes
        cp_kwargs = dict(dimension_semantics=("parallel",))   # batch axis -> both TCs
        if budget > (28 << 20):
            cp_kwargs["vmem_limit_bytes"] = min(budget * 3 // 2, 56 << 20)

        out_p = pl.pallas_call(
            kernel,
            out_shape=jax.ShapeDtypeStruct((pbatch, pdims[-1]), out_dtype),
            grid_spec=pltpu.PrefetchScalarGridSpec(
                num_scalar_prefetch=0,
                grid=(pbatch // tile_b,),
                in_specs=in_specs,
                out_specs=out_spec,
            ),
            compiler_params=pltpu.CompilerParams(**cp_kwargs),
        )(x_p, *flat_params)

        return out_p[:batch, :out_dim]

    return forward, bf16_act


# ---------------------------- references --------------------------------------


def mlp_reference_matched(x, params, bf16_act):
    """Plain-JAX reference mirroring the kernel math (folded BN, bf16 matmuls,
    same activation dtype path)."""
    folded = fold_bn(params)
    n = len(folded)
    h = x.astype(jnp.bfloat16)
    for li, (w, b) in enumerate(folded):
        h = jnp.dot(h, w.astype(jnp.bfloat16),
                    preferred_element_type=jnp.float32) + b
        if li + 1 < n:
            if bf16_act:
                h = h.astype(jnp.bfloat16)
                h = jnp.maximum(h, h * jnp.bfloat16(NEG_SLOPE))
            else:
                h = jnp.maximum(h, h * NEG_SLOPE).astype(jnp.bfloat16)
    return h.astype(jnp.float32)


def mlp_reference_module(x, params):
    """Plain f32 reference of the original eval-mode module math (unfolded BN)."""
    h = x
    for layer in params:
        h = h @ layer["w"] + layer["b"]
        if "gamma" in layer:
            h = ((h - layer["running_mean"])
                 * jax.lax.rsqrt(layer["running_var"] + EPS)
                 * layer["gamma"] + layer["beta"])
            h = jnp.where(h >= 0, h, NEG_SLOPE * h)
        # Dropout / Identity: identity in eval mode
    return h


# ------------------------------- main ----------------------------------------


if __name__ == "__main__":
    key = jax.random.PRNGKey(0)
    k_params, k_x = jax.random.split(key)

    input_dim, dims, output_dim = 16, [32, 32], 8
    batch = 64

    params = make_mlp_params(k_params, input_dim, dims, output_dim)
    x = jax.random.normal(k_x, (batch, input_dim), jnp.float32)

    forward, bf16_act = build_mlp_forward(params)   # one-time prep (fold/pad/cast)
    out = jax.block_until_ready(forward(x))
    assert out.shape == (batch, output_dim)

    # Tight check against a reference that applies the same BN folding + bf16
    # quantization (validates padding / tiling / kernel math).
    ref_matched = mlp_reference_matched(x, params, bf16_act)
    assert jnp.allclose(out, ref_matched, atol=5e-3, rtol=5e-3), \
        "mismatch vs bf16-matched reference"

    # Looser check against the original f32 eval-mode module semantics
    # (validates the BN folding algebra; slack covers bf16 rounding).
    ref_module = mlp_reference_module(x, params)
    assert jnp.allclose(out, ref_module, atol=5e-2, rtol=5e-2), \
        "mismatch vs f32 module reference"

    print("KERNEL_OK")
</pallas_src>

<mosaic_0001>
module attributes {stable_mosaic.version = 11 : i64} {
  func.func @kernel(%arg0: i32, %arg1: memref<128x128xbf16, #tpu.memory_space<vmem>>, %arg2: memref<128x128xbf16, #tpu.memory_space<vmem>>, %arg3: memref<1x128xf32, #tpu.memory_space<vmem>>, %arg4: memref<128x128xbf16, #tpu.memory_space<vmem>>, %arg5: memref<1x128xf32, #tpu.memory_space<vmem>>, %arg6: memref<128x128xbf16, #tpu.memory_space<vmem>>, %arg7: memref<1x128xf32, #tpu.memory_space<vmem>>, %arg8: memref<128x128xf32, #tpu.memory_space<vmem>>) attributes {dimension_semantics = [#tpu.dimension_semantics<parallel>], iteration_bounds = array<i64: 2>, scalar_prefetch = 0 : i64, scratch_operands = 0 : i64, tpu.core_type = #tpu.core_type<tc>, window_params = [{transform_indices = @transform_0, window_bounds = array<i64: 128, 128>}, {pipeline_mode = #tpu.pipeline_mode<synchronous>, transform_indices = @transform_1, window_bounds = array<i64: 128, 128>}, {pipeline_mode = #tpu.pipeline_mode<synchronous>, transform_indices = @transform_2, window_bounds = array<i64: 1, 128>}, {pipeline_mode = #tpu.pipeline_mode<synchronous>, transform_indices = @transform_3, window_bounds = array<i64: 128, 128>}, {pipeline_mode = #tpu.pipeline_mode<synchronous>, transform_indices = @transform_4, window_bounds = array<i64: 1, 128>}, {pipeline_mode = #tpu.pipeline_mode<synchronous>, transform_indices = @transform_5, window_bounds = array<i64: 128, 128>}, {pipeline_mode = #tpu.pipeline_mode<synchronous>, transform_indices = @transform_6, window_bounds = array<i64: 1, 128>}, {transform_indices = @transform_7, window_bounds = array<i64: 128, 128>}]} {
    %c0 = arith.constant 0 : index
    %c0_0 = arith.constant 0 : index
    %0 = vector.load %arg1[%c0, %c0_0] : memref<128x128xbf16, #tpu.memory_space<vmem>>, vector<128x128xbf16>
    %c0_1 = arith.constant 0 : index
    %c0_2 = arith.constant 0 : index
    %1 = vector.load %arg2[%c0_1, %c0_2] : memref<128x128xbf16, #tpu.memory_space<vmem>>, vector<128x128xbf16>
    %cst = arith.constant dense<0.000000e+00> : vector<128x128xf32>
    %2 = tpu.matmul %0, %1, %cst {dimension_numbers = #tpu.dot_dimension_numbers<[1], [0], [0], [1], [0, 0, 1, 1], [], []>} : vector<128x128xbf16>, vector<128x128xbf16>, vector<128x128xf32> -> vector<128x128xf32>
    %c0_3 = arith.constant 0 : index
    %c0_4 = arith.constant 0 : index
    %3 = vector.load %arg3[%c0_3, %c0_4] : memref<1x128xf32, #tpu.memory_space<vmem>>, vector<1x128xf32>
    %4 = vector.broadcast %3 : vector<1x128xf32> to vector<128x128xf32>
    %5 = arith.addf %2, %4 : vector<128x128xf32>
    %cst_5 = arith.constant 0.00999999977 : f32
    %6 = vector.broadcast %cst_5 : f32 to vector<128x128xf32>
    %7 = arith.mulf %5, %6 : vector<128x128xf32>
    %8 = arith.maximumf %5, %7 : vector<128x128xf32>
    %9 = arith.truncf %8 : vector<128x128xf32> to vector<128x128xbf16>
    %c0_6 = arith.constant 0 : index
    %c0_7 = arith.constant 0 : index
    %10 = vector.load %arg4[%c0_6, %c0_7] : memref<128x128xbf16, #tpu.memory_space<vmem>>, vector<128x128xbf16>
    %cst_8 = arith.constant dense<0.000000e+00> : vector<128x128xf32>
    %11 = tpu.matmul %9, %10, %cst_8 {dimension_numbers = #tpu.dot_dimension_numbers<[1], [0], [0], [1], [0, 0, 1, 1], [], []>} : vector<128x128xbf16>, vector<128x128xbf16>, vector<128x128xf32> -> vector<128x128xf32>
    %c0_9 = arith.constant 0 : index
    %c0_10 = arith.constant 0 : index
    %12 = vector.load %arg5[%c0_9, %c0_10] : memref<1x128xf32, #tpu.memory_space<vmem>>, vector<1x128xf32>
    %13 = vector.broadcast %12 : vector<1x128xf32> to vector<128x128xf32>
    %14 = arith.addf %11, %13 : vector<128x128xf32>
    %cst_11 = arith.constant 0.00999999977 : f32
    %15 = vector.broadcast %cst_11 : f32 to vector<128x128xf32>
    %16 = arith.mulf %14, %15 : vector<128x128xf32>
    %17 = arith.maximumf %14, %16 : vector<128x128xf32>
    %18 = arith.truncf %17 : vector<128x128xf32> to vector<128x128xbf16>
    %c0_12 = arith.constant 0 : index
    %c0_13 = arith.constant 0 : index
    %19 = vector.load %arg6[%c0_12, %c0_13] : memref<128x128xbf16, #tpu.memory_space<vmem>>, vector<128x128xbf16>
    %cst_14 = arith.constant dense<0.000000e+00> : vector<128x128xf32>
    %20 = tpu.matmul %18, %19, %cst_14 {dimension_numbers = #tpu.dot_dimension_numbers<[1], [0], [0], [1], [0, 0, 1, 1], [], []>} : vector<128x128xbf16>, vector<128x128xbf16>, vector<128x128xf32> -> vector<128x128xf32>
    %c0_15 = arith.constant 0 : index
    %c0_16 = arith.constant 0 : index
    %21 = vector.load %arg7[%c0_15, %c0_16] : memref<1x128xf32, #tpu.memory_space<vmem>>, vector<1x128xf32>
    %22 = vector.broadcast %21 : vector<1x128xf32> to vector<128x128xf32>
    %23 = arith.addf %20, %22 : vector<128x128xf32>
    %c0_17 = arith.constant 0 : index
    %c0_18 = arith.constant 0 : index
    %24 = vector.load %arg8[%c0_17, %c0_18] : memref<128x128xf32, #tpu.memory_space<vmem>>, vector<128x128xf32>
    tpu.vector_store %arg8[%c0_17, %c0_18], %23 {strides = array<i32>} : memref<128x128xf32, #tpu.memory_space<vmem>>, vector<128x128xf32>,
    return
  }
  func.func @transform_0(%arg0: i32) -> (i32, i32) {
    %c0_i32 = arith.constant 0 : i32
    %c0_i32_0 = arith.constant 0 : i32
    return %arg0, %c0_i32 : i32, i32
  }
  func.func @transform_1(%arg0: i32) -> (i32, i32) {
    %c0_i32 = arith.constant 0 : i32
    %c0_i32_0 = arith.constant 0 : i32
    %c0_i32_1 = arith.constant 0 : i32
    return %c0_i32, %c0_i32_0 : i32, i32
  }
  func.func @transform_2(%arg0: i32) -> (i32, i32) {
    %c0_i32 = arith.constant 0 : i32
    %c0_i32_0 = arith.constant 0 : i32
    %c0_i32_1 = arith.constant 0 : i32
    return %c0_i32, %c0_i32_0 : i32, i32
  }
  func.func @transform_3(%arg0: i32) -> (i32, i32) {
    %c0_i32 = arith.constant 0 : i32
    %c0_i32_0 = arith.constant 0 : i32
    %c0_i32_1 = arith.constant 0 : i32
    return %c0_i32, %c0_i32_0 : i32, i32
  }
  func.func @transform_4(%arg0: i32) -> (i32, i32) {
    %c0_i32 = arith.constant 0 : i32
    %c0_i32_0 = arith.constant 0 : i32
    %c0_i32_1 = arith.constant 0 : i32
    return %c0_i32, %c0_i32_0 : i32, i32
  }
  func.func @transform_5(%arg0: i32) -> (i32, i32) {
    %c0_i32 = arith.constant 0 : i32
    %c0_i32_0 = arith.constant 0 : i32
    %c0_i32_1 = arith.constant 0 : i32
    return %c0_i32, %c0_i32_0 : i32, i32
  }
  func.func @transform_6(%arg0: i32) -> (i32, i32) {
    %c0_i32 = arith.constant 0 : i32
    %c0_i32_0 = arith.constant 0 : i32
    %c0_i32_1 = arith.constant 0 : i32
    return %c0_i32, %c0_i32_0 : i32, i32
  }
  func.func @transform_7(%arg0: i32) -> (i32, i32) {
    %c0_i32 = arith.constant 0 : i32
    %c0_i32_0 = arith.constant 0 : i32
    return %arg0, %c0_i32 : i32, i32
  }
}

</mosaic_0001>

<llo_original>
// kernel: forward.1
$region0: #{forward.1}
  #allocation0 [shape = 'u32[]', space=smem, size = 0x4, offset = 0x4, fixed_abs, tag = 'smem constant byte address 0x4 - core index']
  #allocation1 [shape = 'u32[144,128]{1,0:T(1,128)}', space=vmem, size = 0x12000, scoped, tag = 'internal scratch']
  %s0 = inlined_call_operand.vmem [shape: bf16[256,128], index: 0, kind: input, shape index: {}]
  %s1 = inlined_call_operand.vmem [shape: bf16[128,128], index: 1, kind: input, shape index: {}]
  %s2 = inlined_call_operand.vmem [shape: f32[1,128], index: 2, kind: input, shape index: {}, may-alias: {2,4,6}]
  %s3 = inlined_call_operand.vmem [shape: bf16[128,128], index: 3, kind: input, shape index: {}]
  %s4 = inlined_call_operand.vmem [shape: f32[1,128], index: 4, kind: input, shape index: {}, may-alias: {2,4,6}]
  %s5 = inlined_call_operand.vmem [shape: bf16[128,128], index: 5, kind: input, shape index: {}]
  %s6 = inlined_call_operand.vmem [shape: f32[1,128], index: 6, kind: input, shape index: {}, may-alias: {2,4,6}]
  %s7 = inlined_call_operand.vmem [shape: f32[256,128], index: 7, kind: output, shape index: {}]
  %s8 = sld [smem:[#allocation0]]
  $region61: #{forward.1} parent=0
    _
  %s10 = ssub.s32 1, %s8
  %s11 = scalar_select 0, %s10, %s8
  loop: start=0, step=1, limit=4
  $region2: #{forward.1} parent=0 // loop_pre_header
    _
  $region3: #{forward.1} parent=0 // loop_header
    %s13 = sphi 0, %s17
    %p14 = scmp.ge.s32.totalorder %s13, 4
    %s23 = sphi 0, %s25
    %s26 = sphi 0, %s23
    %s27 = sphi 0, %s26
    %s43 = sphi 0, %s27
    %s47 = sphi 0, %s47
    %s49 = sphi 0, %s47
    %s50 = sphi 0, %s49
    %s64 = sphi 0, %s50
    %s68 = sphi 0, %s68
    %s70 = sphi 0, %s68
    %s71 = sphi 0, %s70
    %s85 = sphi 0, %s71
    %s89 = sphi 0, %s89
    %s91 = sphi 0, %s89
    %s92 = sphi 0, %s91
    %s106 = sphi 0, %s92
    %s110 = sphi 0, %s110
    %s112 = sphi 0, %s110
    %s113 = sphi 0, %s112
    %s127 = sphi 0, %s113
    %s131 = sphi 0, %s131
    %s133 = sphi 0, %s131
    %s134 = sphi 0, %s133
    %s148 = sphi 0, %s134
    %s152 = sphi 0, %s152
    %s154 = sphi 0, %s152
    %s155 = sphi 0, %s154
    %s169 = sphi 0, %s155
    %s175 = sphi 0, %s177
    %s178 = sphi 0, %s175
    %s179 = sphi 0, %s178
    %s195 = sphi 0, %s179
  $region4: #{forward.1} parent=0 // loop_header_branch
    %16 = sbr.rel (%p14) target = $region8
  $region5: #{forward.1} parent=0 // loop_body
    %s18 = ssub.s32 %s13, 1
    %s19 = ssub.s32 %s13, 2
    %s20 = sadd.s32 %s13, 1
    %s21 = ssub.s32 %s13, %s20
    %p22 = scmp.eq.s32.totalorder %s21, 0
    %s24 = sadd.s32 %s23, 1
    %s25 = scalar_select %p22, %s23, %s24
    %p28 = pneg %p22
    %p29 = scmp.eq.s32.totalorder %s13, 1
    %p30 = por %p28, %p29
    %p31 = scmp.ne.s32.totalorder %s23, %s26
    %p32 = scmp.eq.s32.totalorder %s13, 0
    %p33 = por %p31, %p32
    %p34 = scmp.ne.s32.totalorder %s23, %s26
    %p35 = scmp.eq.s32.totalorder %s18, 1
    %p36 = por %p34, %p35
    %p37 = scmp.ne.s32.totalorder %s26, %s27
    %p38 = scmp.eq.s32.totalorder %s18, 0
    %p39 = por %p37, %p38
    %p40 = scmp.ne.s32.totalorder %s26, %s27
    %p41 = scmp.eq.s32.totalorder %s19, 1
    %p42 = por %p40, %p41
    %p44 = scmp.ne.s32.totalorder %s27, %s43
    %p45 = scmp.eq.s32.totalorder %s19, 0
    %p46 = por %p44, %p45
    %s48 = sadd.s32 %s47, 1
    %p51 = scmp.eq.s32.totalorder %s13, 1
    %p52 = scmp.ne.s32.totalorder %s47, %s49
    %p53 = scmp.eq.s32.totalorder %s13, 0
    %p54 = por %p52, %p53
    %p55 = scmp.ne.s32.totalorder %s47, %s49
    %p56 = scmp.eq.s32.totalorder %s18, 1
    %p57 = por %p55, %p56
    %p58 = scmp.ne.s32.totalorder %s49, %s50
    %p59 = scmp.eq.s32.totalorder %s18, 0
    %p60 = por %p58, %p59
    %p61 = scmp.ne.s32.totalorder %s49, %s50
    %p62 = scmp.eq.s32.totalorder %s19, 1
    %p63 = por %p61, %p62
    %p65 = scmp.ne.s32.totalorder %s50, %s64
    %p66 = scmp.eq.s32.totalorder %s19, 0
    %p67 = por %p65, %p66
    %s69 = sadd.s32 %s68, 1
    %p72 = scmp.eq.s32.totalorder %s13, 1
    %p73 = scmp.ne.s32.totalorder %s68, %s70
    %p74 = scmp.eq.s32.totalorder %s13, 0
    %p75 = por %p73, %p74
    %p76 = scmp.ne.s32.totalorder %s68, %s70
    %p77 = scmp.eq.s32.totalorder %s18, 1
    %p78 = por %p76, %p77
    %p79 = scmp.ne.s32.totalorder %s70, %s71
    %p80 = scmp.eq.s32.totalorder %s18, 0
    %p81 = por %p79, %p80
    %p82 = scmp.ne.s32.totalorder %s70, %s71
    %p83 = scmp.eq.s32.totalorder %s19, 1
    %p84 = por %p82, %p83
    %p86 = scmp.ne.s32.totalorder %s71, %s85
    %p87 = scmp.eq.s32.totalorder %s19, 0
    %p88 = por %p86, %p87
    %s90 = sadd.s32 %s89, 1
    %p93 = scmp.eq.s32.totalorder %s13, 1
    %p94 = scmp.ne.s32.totalorder %s89, %s91
    %p95 = scmp.eq.s32.totalorder %s13, 0
    %p96 = por %p94, %p95
    %p97 = scmp.ne.s32.totalorder %s89, %s91
    %p98 = scmp.eq.s32.totalorder %s18, 1
    %p99 = por %p97, %p98
    %p100 = scmp.ne.s32.totalorder %s91, %s92
    %p101 = scmp.eq.s32.totalorder %s18, 0
    %p102 = por %p100, %p101
    %p103 = scmp.ne.s32.totalorder %s91, %s92
    %p104 = scmp.eq.s32.totalorder %s19, 1
    %p105 = por %p103, %p104
    %p107 = scmp.ne.s32.totalorder %s92, %s106
    %p108 = scmp.eq.s32.totalorder %s19, 0
    %p109 = por %p107, %p108
    %s111 = sadd.s32 %s110, 1
    %p114 = scmp.eq.s32.totalorder %s13, 1
    %p115 = scmp.ne.s32.totalorder %s110, %s112
    %p116 = scmp.eq.s32.totalorder %s13, 0
    %p117 = por %p115, %p116
    %p118 = scmp.ne.s32.totalorder %s110, %s112
    %p119 = scmp.eq.s32.totalorder %s18, 1
    %p120 = por %p118, %p119
    %p121 = scmp.ne.s32.totalorder %s112, %s113
    %p122 = scmp.eq.s32.totalorder %s18, 0
    %p123 = por %p121, %p122
    %p124 = scmp.ne.s32.totalorder %s112, %s113
    %p125 = scmp.eq.s32.totalorder %s19, 1
    %p126 = por %p124, %p125
    %p128 = scmp.ne.s32.totalorder %s113, %s127
    %p129 = scmp.eq.s32.totalorder %s19, 0
    %p130 = por %p128, %p129
    %s132 = sadd.s32 %s131, 1
    %p135 = scmp.eq.s32.totalorder %s13, 1
    %p136 = scmp.ne.s32.totalorder %s131, %s133
    %p137 = scmp.eq.s32.totalorder %s13, 0
    %p138 = por %p136, %p137
    %p139 = scmp.ne.s32.totalorder %s131, %s133
    %p140 = scmp.eq.s32.totalorder %s18, 1
    %p141 = por %p139, %p140
    %p142 = scmp.ne.s32.totalorder %s133, %s134
    %p143 = scmp.eq.s32.totalorder %s18, 0
    %p144 = por %p142, %p143
    %p145 = scmp.ne.s32.totalorder %s133, %s134
    %p146 = scmp.eq.s32.totalorder %s19, 1
    %p147 = por %p145, %p146
    %p149 = scmp.ne.s32.totalorder %s134, %s148
    %p150 = scmp.eq.s32.totalorder %s19, 0
    %p151 = por %p149, %p150
    %s153 = sadd.s32 %s152, 1
    %p156 = scmp.eq.s32.totalorder %s13, 1
    %p157 = scmp.ne.s32.totalorder %s152, %s154
    %p158 = scmp.eq.s32.totalorder %s13, 0
    %p159 = por %p157, %p158
    %p160 = scmp.ne.s32.totalorder %s152, %s154
    %p161 = scmp.eq.s32.totalorder %s18, 1
    %p162 = por %p160, %p161
    %p163 = scmp.ne.s32.totalorder %s154, %s155
    %p164 = scmp.eq.s32.totalorder %s18, 0
    %p165 = por %p163, %p164
    %p166 = scmp.ne.s32.totalorder %s154, %s155
    %p167 = scmp.eq.s32.totalorder %s19, 1
    %p168 = por %p166, %p167
    %p170 = scmp.ne.s32.totalorder %s155, %s169
    %p171 = scmp.eq.s32.totalorder %s19, 0
    %p172 = por %p170, %p171
    %s173 = ssub.s32 %s13, %s20
    %p174 = scmp.eq.s32.totalorder %s173, 0
    %s176 = sadd.s32 %s175, 1
    %s177 = scalar_select %p174, %s175, %s176
    %p180 = pneg %p174
    %p181 = scmp.eq.s32.totalorder %s13, 1
    %p182 = por %p180, %p181
    %p183 = scmp.ne.s32.totalorder %s175, %s178
    %p184 = scmp.eq.s32.totalorder %s13, 0
    %p185 = por %p183, %p184
    %p186 = scmp.ne.s32.totalorder %s175, %s178
    %p187 = scmp.eq.s32.totalorder %s18, 1
    %p188 = por %p186, %p187
    %p189 = scmp.ne.s32.totalorder %s178, %s179
    %p190 = scmp.eq.s32.totalorder %s18, 0
    %p191 = por %p189, %p190
    %p192 = scmp.ne.s32.totalorder %s178, %s179
    %p193 = scmp.eq.s32.totalorder %s19, 1
    %p194 = por %p192, %p193
    %p196 = scmp.ne.s32.totalorder %s179, %s195
    %p197 = scmp.eq.s32.totalorder %s19, 0
    %p198 = por %p196, %p197
    %p199 = scmp.le.s32.totalorder 1, %s13
    %p200 = scmp.lt.s32.totalorder %s13, 3
    %p201 = pnand %p199, %p200
    %p202 = pneg %p201
    // Predicated region
    $region9: #{forward.1} parent=5 // pred_check
      _
    $region10: #{forward.1} parent=5 // pred_check_branch
      %204 = sbr.rel (%p201) target = $region12
    $region11: #{forward.1} parent=5 // pred_region
      %s205 = ssub.s32 %s13, 1
      // Predicated region
      $region13: #{forward.1} parent=11 // pred_check
        %p206 = pneg %p60
      $region14: #{forward.1} parent=11 // pred_check_branch
        %208 = sbr.rel (%p206) target = $region16
      $region15: #{forward.1} parent=11 // pred_region
        _
      $region16: #{forward.1} parent=11 // pred_fallthru
        _
      // Predicated region
      $region17: #{forward.1} parent=11 // pred_check
        %p209 = pneg %p81
      $region18: #{forward.1} parent=11 // pred_check_branch
        %211 = sbr.rel (%p209) target = $region20
      $region19: #{forward.1} parent=11 // pred_region
        _
      $region20: #{forward.1} parent=11 // pred_fallthru
        _
      // Predicated region
      $region21: #{forward.1} parent=11 // pred_check
        %p212 = pneg %p102
      $region22: #{forward.1} parent=11 // pred_check_branch
        %214 = sbr.rel (%p212) target = $region24
      $region23: #{forward.1} parent=11 // pred_region
        _
      $region24: #{forward.1} parent=11 // pred_fallthru
        _
      // Predicated region
      $region25: #{forward.1} parent=11 // pred_check
        %p215 = pneg %p123
      $region26: #{forward.1} parent=11 // pred_check_branch
        %217 = sbr.rel (%p215) target = $region28
      $region27: #{forward.1} parent=11 // pred_region
        _
      $region28: #{forward.1} parent=11 // pred_fallthru
        _
      // Predicated region
      $region29: #{forward.1} parent=11 // pred_check
        %p218 = pneg %p144
      $region30: #{forward.1} parent=11 // pred_check_branch
        %220 = sbr.rel (%p218) target = $region32
      $region31: #{forward.1} parent=11 // pred_region
        _
      $region32: #{forward.1} parent=11 // pred_fallthru
        _
      // Predicated region
      $region33: #{forward.1} parent=11 // pred_check
        %p221 = pneg %p165
      $region34: #{forward.1} parent=11 // pred_check_branch
        %223 = sbr.rel (%p221) target = $region36
      $region35: #{forward.1} parent=11 // pred_region
        _
      $region36: #{forward.1} parent=11 // pred_fallthru
        _
    $region12: #{forward.1} parent=5 // pred_fallthru
      _
    %p224 = scmp.lt.s32.totalorder %s13, 2
    // Predicated region
    $region37: #{forward.1} parent=5 // pred_check
      %p225 = pneg %p224
    $region38: #{forward.1} parent=5 // pred_check_branch
      %227 = sbr.rel (%p225) target = $region40
    $region39: #{forward.1} parent=5 // pred_region
      // Predicated region
      $region41: #{forward.1} parent=39 // pred_check
        %p228 = pneg %p33
      $region42: #{forward.1} parent=39 // pred_check_branch
        %230 = sbr.rel (%p228) target = $region44
      $region43: #{forward.1} parent=39 // pred_region
        %s231 = smul.u32 16, %s13
        %p232 = scmp.lt.s32.totalorder %s231, 31
        %s233 = scalar_select %p232, %s231, 31
        %s234 = smul.addr %s233, 4
        %s235 = scalar_lea.vmem %s0, %s234
        %s236 = smul.u32 16, %s13
      $region44: #{forward.1} parent=39 // pred_fallthru
        _
    $region40: #{forward.1} parent=5 // pred_fallthru
      _
    %p237 = scmp.le.s32.totalorder 1, %s13
    %p238 = scmp.lt.s32.totalorder %s13, 3
    %p239 = pnand %p237, %p238
    %p240 = pneg %p239
    // Predicated region
    $region45: #{forward.1} parent=5 // pred_check
      _
    $region46: #{forward.1} parent=5 // pred_check_branch
      %242 = sbr.rel (%p239) target = $region48
    $region47: #{forward.1} parent=5 // pred_region
      %s243 = ssub.s32 %s13, 1
      %s244 = smul.u32 16, %s18
      %p245 = scmp.lt.s32.totalorder %s244, 31
      %s246 = scalar_select %p245, %s244, 31
      %s247 = smul.addr %s246, 4
      %s248 = scalar_lea.vmem %s0, %s247
      %p249 = pneg %p39
      %p250 = pneg %p36
      %p251 = pneg %p60
      %p252 = pneg %p57
      %p253 = pneg %p81
      %p254 = pneg %p78
      %p255 = pneg %p102
      %p256 = pneg %p99
      %p257 = pneg %p123
      %p258 = pneg %p120
      %p259 = pneg %p144
      %p260 = pneg %p141
      %p261 = pneg %p165
      %p262 = pneg %p162
      %p263 = pneg %p191
      %p264 = pneg %p188
      %s265 = smul.u32 16, %s18
      %p266 = scmp.lt.s32.totalorder %s265, 31
      %s267 = scalar_select %p266, %s265, 31
      %s268 = smul.addr %s267, 8
      %s269 = scalar_lea.vmem %s7, %s268
      %s270 = smul.u32 16, %s18
      %p271 = scmp.lt.s32.totalorder %s270, 31
      %s272 = scalar_select %p271, %s270, 31
      %s273 = smul.addr %s272, 4
      %s274 = scalar_lea.vmem %s0, %s273
      %s275 = smul.u32 16, %s18
      %s276 = smul.u32 16, %s18
      %p277 = scmp.lt.s32.totalorder %s276, 31
      %s278 = scalar_select %p277, %s276, 31
      %s279 = smul.addr %s278, 8
      %s280 = scalar_lea.vmem %s7, %s279
      %s281 = smul.u32 16, %s18
      %v283 = vld [vmem:[%s274] sm:$0xf]
      %v284 = vld [vmem:[%s274 + $0x4] sm:$0xf]
      %v285 = vld [vmem:[%s274 + $0x8] sm:$0xf]
      %v286 = vld [vmem:[%s274 + $0xc] sm:$0xf]
      %v287 = vld [vmem:[%s274 + $0x10] sm:$0xf]
      %v288 = vld [vmem:[%s274 + $0x14] sm:$0xf]
      %v289 = vld [vmem:[%s274 + $0x18] sm:$0xf]
      %v290 = vld [vmem:[%s274 + $0x1c] sm:$0xf]
      %v291 = vld [vmem:[%s274 + $0x20] sm:$0xf]
      %v292 = vld [vmem:[%s274 + $0x24] sm:$0xf]
      %v293 = vld [vmem:[%s274 + $0x28] sm:$0xf]
      %v294 = vld [vmem:[%s274 + $0x2c] sm:$0xf]
      %v295 = vld [vmem:[%s274 + $0x30] sm:$0xf]
      %v296 = vld [vmem:[%s274 + $0x34] sm:$0xf]
      %v297 = vld [vmem:[%s274 + $0x38] sm:$0xf]
      %v298 = vld [vmem:[%s274 + $0x3c] sm:$0xf]
      %v299 = vld [vmem:[%s1] sm:$0xf]
      %v300 = vld [vmem:[%s1 + $0x4] sm:$0xf]
      %v301 = vld [vmem:[%s1 + $0x8] sm:$0xf]
      %v302 = vld [vmem:[%s1 + $0xc] sm:$0xf]
      %v303 = vld [vmem:[%s1 + $0x10] sm:$0xf]
      %v304 = vld [vmem:[%s1 + $0x14] sm:$0xf]
      %v305 = vld [vmem:[%s1 + $0x18] sm:$0xf]
      %v306 = vld [vmem:[%s1 + $0x1c] sm:$0xf]
      %v307 = vld [vmem:[%s1 + $0x20] sm:$0xf]
      %v308 = vld [vmem:[%s1 + $0x24] sm:$0xf]
      %v309 = vld [vmem:[%s1 + $0x28] sm:$0xf]
      %v310 = vld [vmem:[%s1 + $0x2c] sm:$0xf]
      %v311 = vld [vmem:[%s1 + $0x30] sm:$0xf]
      %v312 = vld [vmem:[%s1 + $0x34] sm:$0xf]
      %v313 = vld [vmem:[%s1 + $0x38] sm:$0xf]
      %v314 = vld [vmem:[%s1 + $0x3c] sm:$0xf]
      %v315 = vld [vmem:[%s2] sm:$0x1]
      %v317 = vlaneseq
      %v318 = vshrl.u32 %v317, 7
      %v319 = vsub.s32 0, %v318
      %v320 = vrot.slane %v315, %v319
      %v338 = vunpack.c.l.b16 %v283
      %v339 = vunpack.c.l.b16 %v284
      %v340 = vunpack.c.l.b16 %v285
      %v341 = vunpack.c.l.b16 %v286
      %v342 = vunpack.c.l.b16 %v287
      %v343 = vunpack.c.l.b16 %v288
      %v344 = vunpack.c.l.b16 %v289
      %v345 = vunpack.c.l.b16 %v290
      %v346 = vunpack.c.l.b16 %v291
      %v347 = vunpack.c.l.b16 %v292
      %v348 = vunpack.c.l.b16 %v293
      %v349 = vunpack.c.l.b16 %v294
      %v350 = vunpack.c.l.b16 %v295
      %v351 = vunpack.c.l.b16 %v296
      %v352 = vunpack.c.l.b16 %v297
      %v353 = vunpack.c.l.b16 %v298
      %v354 = vpack.c.b16 %v339, %v338
      %v355 = vpack.c.b16 %v341, %v340
      %v356 = vpack.c.b16 %v343, %v342
      %v357 = vpack.c.b16 %v345, %v344
      %v358 = vpack.c.b16 %v347, %v346
      %v359 = vpack.c.b16 %v349, %v348
      %v360 = vpack.c.b16 %v351, %v350
      %v361 = vpack.c.b16 %v353, %v352
      %v386 = vunpack.c.l.b16 %v299
      %v387 = vunpack.c.l.b16 %v300
      %v388 = vunpack.c.l.b16 %v301
      %v389 = vunpack.c.l.b16 %v302
      %v390 = vunpack.c.l.b16 %v303
      %v391 = vunpack.c.l.b16 %v304
      %v392 = vunpack.c.l.b16 %v305
      %v393 = vunpack.c.l.b16 %v306
      %v394 = vunpack.c.l.b16 %v307
      %v395 = vunpack.c.l.b16 %v308
      %v396 = vunpack.c.l.b16 %v309
      %v397 = vunpack.c.l.b16 %v310
      %v398 = vunpack.c.l.b16 %v311
      %v399 = vunpack.c.l.b16 %v312
      %v400 = vunpack.c.l.b16 %v313
      %v401 = vunpack.c.l.b16 %v314
      %v402 = vpack.c.b16 %v387, %v386
      %v403 = vpack.c.b16 %v389, %v388
      %v404 = vpack.c.b16 %v391, %v390
      %v405 = vpack.c.b16 %v393, %v392
      %v406 = vpack.c.b16 %v395, %v394
      %v407 = vpack.c.b16 %v397, %v396
      %v408 = vpack.c.b16 %v399, %v398
      %v409 = vpack.c.b16 %v401, %v400
      %418 = vmatprep.subr.bf16.mxu0 0
      %419 = vmatpush1.bf16.msra.mxu0 %v409
      %420 = vmatprep.subr.bf16.mxu0 0
      %421 = vmatpush1.bf16.msra.mxu0 %v408
      %422 = vmatprep.subr.bf16.mxu0 0
      %423 = vmatpush1.bf16.msra.mxu0 %v407
      %424 = vmatprep.subr.bf16.mxu0 0
      %425 = vmatpush1.bf16.msra.mxu0 %v406
      %426 = vmatprep.subr.bf16.mxu0 0
      %427 = vmatpush1.bf16.msra.mxu0 %v405
      %428 = vmatprep.subr.bf16.mxu0 0
      %429 = vmatpush1.bf16.msra.mxu0 %v404
      %430 = vmatprep.subr.bf16.mxu0 0
      %431 = vmatpush1.bf16.msra.mxu0 %v403
      %432 = vmatprep.subr.bf16.mxu0 0
      %433 = vmatpush1.bf16.msra.mxu0 %v402
      %434 = vmatprep.subr.bf16.mxu0 0
      %435 = vmatpush2.bf16.msra.mxu0 0
      %436 = vmatprep.subr.bf16.mxu0 0
      %437 = vmatpush2.bf16.msra.mxu0 0
      %438 = vmatprep.subr.bf16.mxu0 0
      %439 = vmatpush2.bf16.msra.mxu0 0
      %440 = vmatprep.subr.bf16.mxu0 0
      %441 = vmatpush2.bf16.msra.mxu0 0
      %442 = vmatprep.subr.bf16.mxu0 0
      %443 = vmatpush2.bf16.msra.mxu0 0
      %444 = vmatprep.subr.bf16.mxu0 0
      %445 = vmatpush2.bf16.msra.mxu0 0
      %446 = vmatprep.subr.bf16.mxu0 0
      %447 = vmatpush2.bf16.msra.mxu0 0
      %448 = vmatprep.subr.bf16.mxu0 0
      %449 = vmatpush2.bf16.msra.mxu0 0
      %450 = vmatprep.mubr.bf16.mxu0 0
      %451 = vmatmul.mubr.bf16.gmra.mxu0 %v354
      %v452 = vpop.f32.mrf.mxu0
      %v453 = vadd.f32 %v320, %v452
      %v454 = vpop.f32.mrf.mxu0
      %v455 = vpop.f32.mrf.mxu0
      %v456 = vadd.f32 %v320, %v455
      %v457 = vpop.f32.mrf.mxu0
      %458 = vmatprep.mubr.bf16.mxu0 0
      %459 = vmatmul.mubr.bf16.gmra.mxu0 %v355
      %v460 = vpop.f32.mrf.mxu0
      %v461 = vadd.f32 %v320, %v460
      %v462 = vpop.f32.mrf.mxu0
      %v463 = vpop.f32.mrf.mxu0
      %v464 = vadd.f32 %v320, %v463
      %v465 = vpop.f32.mrf.mxu0
      %466 = vmatprep.mubr.bf16.mxu0 0
      %467 = vmatmul.mubr.bf16.gmra.mxu0 %v356
      %v468 = vpop.f32.mrf.mxu0
      %v469 = vadd.f32 %v320, %v468
      %v470 = vpop.f32.mrf.mxu0
      %v471 = vpop.f32.mrf.mxu0
      %v472 = vadd.f32 %v320, %v471
      %v473 = vpop.f32.mrf.mxu0
      %474 = vmatprep.mubr.bf16.mxu0 0
      %475 = vmatmul.mubr.bf16.gmra.mxu0 %v357
      %v476 = vpop.f32.mrf.mxu0
      %v477 = vadd.f32 %v320, %v476
      %v478 = vpop.f32.mrf.mxu0
      %v479 = vpop.f32.mrf.mxu0
      %v480 = vadd.f32 %v320, %v479
      %v481 = vpop.f32.mrf.mxu0
      %482 = vmatprep.mubr.bf16.mxu0 0
      %483 = vmatmul.mubr.bf16.gmra.mxu0 %v358
      %v484 = vpop.f32.mrf.mxu0
      %v485 = vadd.f32 %v320, %v484
      %v486 = vpop.f32.mrf.mxu0
      %v487 = vpop.f32.mrf.mxu0
      %v488 = vadd.f32 %v320, %v487
      %v489 = vpop.f32.mrf.mxu0
      %490 = vmatprep.mubr.bf16.mxu0 0
      %491 = vmatmul.mubr.bf16.gmra.mxu0 %v359
      %v492 = vpop.f32.mrf.mxu0
      %v493 = vadd.f32 %v320, %v492
      %v494 = vpop.f32.mrf.mxu0
      %v495 = vpop.f32.mrf.mxu0
      %v496 = vadd.f32 %v320, %v495
      %v497 = vpop.f32.mrf.mxu0
      %498 = vmatprep.mubr.bf16.mxu0 0
      %499 = vmatmul.mubr.bf16.gmra.mxu0 %v360
      %v500 = vpop.f32.mrf.mxu0
      %v501 = vadd.f32 %v320, %v500
      %v502 = vpop.f32.mrf.mxu0
      %v503 = vpop.f32.mrf.mxu0
      %v504 = vadd.f32 %v320, %v503
      %v505 = vpop.f32.mrf.mxu0
      %506 = vmatprep.mubr.bf16.mxu0 0
      %507 = vmatmul.mubr.bf16.gmra.mxu0 %v361
      %v508 = vpop.f32.mrf.mxu0
      %v509 = vadd.f32 %v320, %v508
      %v510 = vpop.f32.mrf.mxu0
      %v511 = vpop.f32.mrf.mxu0
      %v512 = vadd.f32 %v320, %v511
      %v513 = vpop.f32.mrf.mxu0
      %514 = vdwg.mxu0
      %v515 = vmul.f32 %v453, 0.01
      %v516 = vmul.f32 %v456, 0.01
      %v517 = vmul.f32 %v461, 0.01
      %v518 = vmul.f32 %v464, 0.01
      %v519 = vmul.f32 %v469, 0.01
      %v520 = vmul.f32 %v472, 0.01
      %v521 = vmul.f32 %v477, 0.01
      %v522 = vmul.f32 %v480, 0.01
      %v523 = vmul.f32 %v485, 0.01
      %v524 = vmul.f32 %v488, 0.01
      %v525 = vmul.f32 %v493, 0.01
      %v526 = vmul.f32 %v496, 0.01
      %v527 = vmul.f32 %v501, 0.01
      %v528 = vmul.f32 %v504, 0.01
      %v529 = vmul.f32 %v509, 0.01
      %v530 = vmul.f32 %v512, 0.01
      %v531 = vmax.f32 %v453, %v515
      %v532 = vmax.f32 %v456, %v516
      %v533 = vmax.f32 %v461, %v517
      %v534 = vmax.f32 %v464, %v518
      %v535 = vmax.f32 %v469, %v519
      %v536 = vmax.f32 %v472, %v520
      %v537 = vmax.f32 %v477, %v521
      %v538 = vmax.f32 %v480, %v522
      %v539 = vmax.f32 %v485, %v523
      %v540 = vmax.f32 %v488, %v524
      %v541 = vmax.f32 %v493, %v525
      %v542 = vmax.f32 %v496, %v526
      %v543 = vmax.f32 %v501, %v527
      %v544 = vmax.f32 %v504, %v528
      %v545 = vmax.f32 %v509, %v529
      %v546 = vmax.f32 %v512, %v530
      %v547 = vpack.c.bf16 %v532, %v531
      %v548 = vpack.c.bf16 %v534, %v533
      %v549 = vpack.c.bf16 %v536, %v535
      %v550 = vpack.c.bf16 %v538, %v537
      %v551 = vpack.c.bf16 %v540, %v539
      %v552 = vpack.c.bf16 %v542, %v541
      %v553 = vpack.c.bf16 %v544, %v543
      %v554 = vpack.c.bf16 %v546, %v545
      %v555 = vld [vmem:[%s3] sm:$0xf]
      %v556 = vld [vmem:[%s3 + $0x4] sm:$0xf]
      %v557 = vld [vmem:[%s3 + $0x8] sm:$0xf]
      %v558 = vld [vmem:[%s3 + $0xc] sm:$0xf]
      %v559 = vld [vmem:[%s3 + $0x10] sm:$0xf]
      %v560 = vld [vmem:[%s3 + $0x14] sm:$0xf]
      %v561 = vld [vmem:[%s3 + $0x18] sm:$0xf]
      %v562 = vld [vmem:[%s3 + $0x1c] sm:$0xf]
      %v563 = vld [vmem:[%s3 + $0x20] sm:$0xf]
      %v564 = vld [vmem:[%s3 + $0x24] sm:$0xf]
      %v565 = vld [vmem:[%s3 + $0x28] sm:$0xf]
      %v566 = vld [vmem:[%s3 + $0x2c] sm:$0xf]
      %v567 = vld [vmem:[%s3 + $0x30] sm:$0xf]
      %v568 = vld [vmem:[%s3 + $0x34] sm:$0xf]
      %v569 = vld [vmem:[%s3 + $0x38] sm:$0xf]
      %v570 = vld [vmem:[%s3 + $0x3c] sm:$0xf]
      %v571 = vld [vmem:[%s4] sm:$0x1]
      %v573 = vlaneseq
      %v574 = vshrl.u32 %v573, 7
      %v575 = vsub.s32 0, %v574
      %v576 = vrot.slane %v571, %v575
      %v594 = vunpack.c.l.b16 %v555
      %v595 = vunpack.c.l.b16 %v556
      %v596 = vunpack.c.l.b16 %v557
      %v597 = vunpack.c.l.b16 %v558
      %v598 = vunpack.c.l.b16 %v559
      %v599 = vunpack.c.l.b16 %v560
      %v600 = vunpack.c.l.b16 %v561
      %v601 = vunpack.c.l.b16 %v562
      %v602 = vunpack.c.l.b16 %v563
      %v603 = vunpack.c.l.b16 %v564
      %v604 = vunpack.c.l.b16 %v565
      %v605 = vunpack.c.l.b16 %v566
      %v606 = vunpack.c.l.b16 %v567
      %v607 = vunpack.c.l.b16 %v568
      %v608 = vunpack.c.l.b16 %v569
      %v609 = vunpack.c.l.b16 %v570
      %v610 = vpack.c.b16 %v595, %v594
      %v611 = vpack.c.b16 %v597, %v596
      %v612 = vpack.c.b16 %v599, %v598
      %v613 = vpack.c.b16 %v601, %v600
      %v614 = vpack.c.b16 %v603, %v602
      %v615 = vpack.c.b16 %v605, %v604
      %v616 = vpack.c.b16 %v607, %v606
      %v617 = vpack.c.b16 %v609, %v608
      %626 = vmatprep.subr.bf16.mxu0 0
      %627 = vmatpush1.bf16.msra.mxu0 %v617
      %628 = vmatprep.subr.bf16.mxu0 0
      %629 = vmatpush1.bf16.msra.mxu0 %v616
      %630 = vmatprep.subr.bf16.mxu0 0
      %631 = vmatpush1.bf16.msra.mxu0 %v615
      %632 = vmatprep.subr.bf16.mxu0 0
      %633 = vmatpush1.bf16.msra.mxu0 %v614
      %634 = vmatprep.subr.bf16.mxu0 0
      %635 = vmatpush1.bf16.msra.mxu0 %v613
      %636 = vmatprep.subr.bf16.mxu0 0
      %637 = vmatpush1.bf16.msra.mxu0 %v612
      %638 = vmatprep.subr.bf16.mxu0 0
      %639 = vmatpush1.bf16.msra.mxu0 %v611
      %640 = vmatprep.subr.bf16.mxu0 0
      %641 = vmatpush1.bf16.msra.mxu0 %v610
      %642 = vmatprep.subr.bf16.mxu0 0
      %643 = vmatpush2.bf16.msra.mxu0 0
      %644 = vmatprep.subr.bf16.mxu0 0
      %645 = vmatpush2.bf16.msra.mxu0 0
      %646 = vmatprep.subr.bf16.mxu0 0
      %647 = vmatpush2.bf16.msra.mxu0 0
      %648 = vmatprep.subr.bf16.mxu0 0
      %649 = vmatpush2.bf16.msra.mxu0 0
      %650 = vmatprep.subr.bf16.mxu0 0
      %651 = vmatpush2.bf16.msra.mxu0 0
      %652 = vmatprep.subr.bf16.mxu0 0
      %653 = vmatpush2.bf16.msra.mxu0 0
      %654 = vmatprep.subr.bf16.mxu0 0
      %655 = vmatpush2.bf16.msra.mxu0 0
      %656 = vmatprep.subr.bf16.mxu0 0
      %657 = vmatpush2.bf16.msra.mxu0 0
      %658 = vmatprep.mubr.bf16.mxu0 0
      %659 = vmatmul.mubr.bf16.gmra.mxu0 %v547
      %v660 = vpop.f32.mrf.mxu0
      %v661 = vadd.f32 %v576, %v660
      %v662 = vpop.f32.mrf.mxu0
      %v663 = vpop.f32.mrf.mxu0
      %v664 = vadd.f32 %v576, %v663
      %v665 = vpop.f32.mrf.mxu0
      %666 = vmatprep.mubr.bf16.mxu0 0
      %667 = vmatmul.mubr.bf16.gmra.mxu0 %v548
      %v668 = vpop.f32.mrf.mxu0
      %v669 = vadd.f32 %v576, %v668
      %v670 = vpop.f32.mrf.mxu0
      %v671 = vpop.f32.mrf.mxu0
      %v672 = vadd.f32 %v576, %v671
      %v673 = vpop.f32.mrf.mxu0
      %674 = vmatprep.mubr.bf16.mxu0 0
      %675 = vmatmul.mubr.bf16.gmra.mxu0 %v549
      %v676 = vpop.f32.mrf.mxu0
      %v677 = vadd.f32 %v576, %v676
      %v678 = vpop.f32.mrf.mxu0
      %v679 = vpop.f32.mrf.mxu0
      %v680 = vadd.f32 %v576, %v679
      %v681 = vpop.f32.mrf.mxu0
      %682 = vmatprep.mubr.bf16.mxu0 0
      %683 = vmatmul.mubr.bf16.gmra.mxu0 %v550
      %v684 = vpop.f32.mrf.mxu0
      %v685 = vadd.f32 %v576, %v684
      %v686 = vpop.f32.mrf.mxu0
      %v687 = vpop.f32.mrf.mxu0
      %v688 = vadd.f32 %v576, %v687
      %v689 = vpop.f32.mrf.mxu0
      %690 = vmatprep.mubr.bf16.mxu0 0
      %691 = vmatmul.mubr.bf16.gmra.mxu0 %v551
      %v692 = vpop.f32.mrf.mxu0
      %v693 = vadd.f32 %v576, %v692
      %v694 = vpop.f32.mrf.mxu0
      %v695 = vpop.f32.mrf.mxu0
      %v696 = vadd.f32 %v576, %v695
      %v697 = vpop.f32.mrf.mxu0
      %698 = vmatprep.mubr.bf16.mxu0 0
      %699 = vmatmul.mubr.bf16.gmra.mxu0 %v552
      %v700 = vpop.f32.mrf.mxu0
      %v701 = vadd.f32 %v576, %v700
      %v702 = vpop.f32.mrf.mxu0
      %v703 = vpop.f32.mrf.mxu0
      %v704 = vadd.f32 %v576, %v703
      %v705 = vpop.f32.mrf.mxu0
      %706 = vmatprep.mubr.bf16.mxu0 0
      %707 = vmatmul.mubr.bf16.gmra.mxu0 %v553
      %v708 = vpop.f32.mrf.mxu0
      %v709 = vadd.f32 %v576, %v708
      %v710 = vpop.f32.mrf.mxu0
      %v711 = vpop.f32.mrf.mxu0
      %v712 = vadd.f32 %v576, %v711
      %v713 = vpop.f32.mrf.mxu0
      %714 = vmatprep.mubr.bf16.mxu0 0
      %715 = vmatmul.mubr.bf16.gmra.mxu0 %v554
      %v716 = vpop.f32.mrf.mxu0
      %v717 = vadd.f32 %v576, %v716
      %v718 = vpop.f32.mrf.mxu0
      %v719 = vpop.f32.mrf.mxu0
      %v720 = vadd.f32 %v576, %v719
      %v721 = vpop.f32.mrf.mxu0
      %722 = vdwg.mxu0
      %v723 = vmul.f32 %v661, 0.01
      %v724 = vmul.f32 %v664, 0.01
      %v725 = vmul.f32 %v669, 0.01
      %v726 = vmul.f32 %v672, 0.01
      %v727 = vmul.f32 %v677, 0.01
      %v728 = vmul.f32 %v680, 0.01
      %v729 = vmul.f32 %v685, 0.01
      %v730 = vmul.f32 %v688, 0.01
      %v731 = vmul.f32 %v693, 0.01
      %v732 = vmul.f32 %v696, 0.01
      %v733 = vmul.f32 %v701, 0.01
      %v734 = vmul.f32 %v704, 0.01
      %v735 = vmul.f32 %v709, 0.01
      %v736 = vmul.f32 %v712, 0.01
      %v737 = vmul.f32 %v717, 0.01
      %v738 = vmul.f32 %v720, 0.01
      %v739 = vmax.f32 %v661, %v723
      %v740 = vmax.f32 %v664, %v724
      %v741 = vmax.f32 %v669, %v725
      %v742 = vmax.f32 %v672, %v726
      %v743 = vmax.f32 %v677, %v727
      %v744 = vmax.f32 %v680, %v728
      %v745 = vmax.f32 %v685, %v729
      %v746 = vmax.f32 %v688, %v730
      %v747 = vmax.f32 %v693, %v731
      %v748 = vmax.f32 %v696, %v732
      %v749 = vmax.f32 %v701, %v733
      %v750 = vmax.f32 %v704, %v734
      %v751 = vmax.f32 %v709, %v735
      %v752 = vmax.f32 %v712, %v736
      %v753 = vmax.f32 %v717, %v737
      %v754 = vmax.f32 %v720, %v738
      %v755 = vpack.c.bf16 %v740, %v739
      %v756 = vpack.c.bf16 %v742, %v741
      %v757 = vpack.c.bf16 %v744, %v743
      %v758 = vpack.c.bf16 %v746, %v745
      %v759 = vpack.c.bf16 %v748, %v747
      %v760 = vpack.c.bf16 %v750, %v749
      %v761 = vpack.c.bf16 %v752, %v751
      %v762 = vpack.c.bf16 %v754, %v753
      %v763 = vld [vmem:[%s5] sm:$0xf]
      %v764 = vld [vmem:[%s5 + $0x4] sm:$0xf]
      %v765 = vld [vmem:[%s5 + $0x8] sm:$0xf]
      %v766 = vld [vmem:[%s5 + $0xc] sm:$0xf]
      %v767 = vld [vmem:[%s5 + $0x10] sm:$0xf]
      %v768 = vld [vmem:[%s5 + $0x14] sm:$0xf]
      %v769 = vld [vmem:[%s5 + $0x18] sm:$0xf]
      %v770 = vld [vmem:[%s5 + $0x1c] sm:$0xf]
      %v771 = vld [vmem:[%s5 + $0x20] sm:$0xf]
      %v772 = vld [vmem:[%s5 + $0x24] sm:$0xf]
      %v773 = vld [vmem:[%s5 + $0x28] sm:$0xf]
      %v774 = vld [vmem:[%s5 + $0x2c] sm:$0xf]
      %v775 = vld [vmem:[%s5 + $0x30] sm:$0xf]
      %v776 = vld [vmem:[%s5 + $0x34] sm:$0xf]
      %v777 = vld [vmem:[%s5 + $0x38] sm:$0xf]
      %v778 = vld [vmem:[%s5 + $0x3c] sm:$0xf]
      %v779 = vld [vmem:[%s6] sm:$0x1]
      %v781 = vlaneseq
      %v782 = vshrl.u32 %v781, 7
      %v783 = vsub.s32 0, %v782
      %v784 = vrot.slane %v779, %v783
      %v802 = vunpack.c.l.b16 %v763
      %v803 = vunpack.c.l.b16 %v764
      %v804 = vunpack.c.l.b16 %v765
      %v805 = vunpack.c.l.b16 %v766
      %v806 = vunpack.c.l.b16 %v767
      %v807 = vunpack.c.l.b16 %v768
      %v808 = vunpack.c.l.b16 %v769
      %v809 = vunpack.c.l.b16 %v770
      %v810 = vunpack.c.l.b16 %v771
      %v811 = vunpack.c.l.b16 %v772
      %v812 = vunpack.c.l.b16 %v773
      %v813 = vunpack.c.l.b16 %v774
      %v814 = vunpack.c.l.b16 %v775
      %v815 = vunpack.c.l.b16 %v776
      %v816 = vunpack.c.l.b16 %v777
      %v817 = vunpack.c.l.b16 %v778
      %v818 = vpack.c.b16 %v803, %v802
      %v819 = vpack.c.b16 %v805, %v804
      %v820 = vpack.c.b16 %v807, %v806
      %v821 = vpack.c.b16 %v809, %v808
      %v822 = vpack.c.b16 %v811, %v810
      %v823 = vpack.c.b16 %v813, %v812
      %v824 = vpack.c.b16 %v815, %v814
      %v825 = vpack.c.b16 %v817, %v816
      %834 = vmatprep.subr.bf16.mxu0 0
      %835 = vmatpush1.bf16.msra.mxu0 %v825
      %836 = vmatprep.subr.bf16.mxu0 0
      %837 = vmatpush1.bf16.msra.mxu0 %v824
      %838 = vmatprep.subr.bf16.mxu0 0
      %839 = vmatpush1.bf16.msra.mxu0 %v823
      %840 = vmatprep.subr.bf16.mxu0 0
      %841 = vmatpush1.bf16.msra.mxu0 %v822
      %842 = vmatprep.subr.bf16.mxu0 0
      %843 = vmatpush1.bf16.msra.mxu0 %v821
      %844 = vmatprep.subr.bf16.mxu0 0
      %845 = vmatpush1.bf16.msra.mxu0 %v820
      %846 = vmatprep.subr.bf16.mxu0 0
      %847 = vmatpush1.bf16.msra.mxu0 %v819
      %848 = vmatprep.subr.bf16.mxu0 0
      %849 = vmatpush1.bf16.msra.mxu0 %v818
      %850 = vmatprep.subr.bf16.mxu0 0
      %851 = vmatpush2.bf16.msra.mxu0 0
      %852 = vmatprep.subr.bf16.mxu0 0
      %853 = vmatpush2.bf16.msra.mxu0 0
      %854 = vmatprep.subr.bf16.mxu0 0
      %855 = vmatpush2.bf16.msra.mxu0 0
      %856 = vmatprep.subr.bf16.mxu0 0
      %857 = vmatpush2.bf16.msra.mxu0 0
      %858 = vmatprep.subr.bf16.mxu0 0
      %859 = vmatpush2.bf16.msra.mxu0 0
      %860 = vmatprep.subr.bf16.mxu0 0
      %861 = vmatpush2.bf16.msra.mxu0 0
      %862 = vmatprep.subr.bf16.mxu0 0
      %863 = vmatpush2.bf16.msra.mxu0 0
      %864 = vmatprep.subr.bf16.mxu0 0
      %865 = vmatpush2.bf16.msra.mxu0 0
      %866 = vmatprep.mubr.bf16.mxu0 0
      %867 = vmatmul.mubr.bf16.gmra.mxu0 %v755
      %v868 = vpop.f32.mrf.mxu0
      %v869 = vadd.f32 %v784, %v868
      %v870 = vpop.f32.mrf.mxu0
      %v871 = vpop.f32.mrf.mxu0
      %v872 = vadd.f32 %v784, %v871
      %v873 = vpop.f32.mrf.mxu0
      %874 = vmatprep.mubr.bf16.mxu0 0
      %875 = vmatmul.mubr.bf16.gmra.mxu0 %v756
      %v876 = vpop.f32.mrf.mxu0
      %v877 = vadd.f32 %v784, %v876
      %v878 = vpop.f32.mrf.mxu0
      %v879 = vpop.f32.mrf.mxu0
      %v880 = vadd.f32 %v784, %v879
      %v881 = vpop.f32.mrf.mxu0
      %882 = vmatprep.mubr.bf16.mxu0 0
      %883 = vmatmul.mubr.bf16.gmra.mxu0 %v757
      %v884 = vpop.f32.mrf.mxu0
      %v885 = vadd.f32 %v784, %v884
      %v886 = vpop.f32.mrf.mxu0
      %v887 = vpop.f32.mrf.mxu0
      %v888 = vadd.f32 %v784, %v887
      %v889 = vpop.f32.mrf.mxu0
      %890 = vmatprep.mubr.bf16.mxu0 0
      %891 = vmatmul.mubr.bf16.gmra.mxu0 %v758
      %v892 = vpop.f32.mrf.mxu0
      %v893 = vadd.f32 %v784, %v892
      %v894 = vpop.f32.mrf.mxu0
      %v895 = vpop.f32.mrf.mxu0
      %v896 = vadd.f32 %v784, %v895
      %v897 = vpop.f32.mrf.mxu0
      %898 = vmatprep.mubr.bf16.mxu0 0
      %899 = vmatmul.mubr.bf16.gmra.mxu0 %v759
      %v900 = vpop.f32.mrf.mxu0
      %v901 = vadd.f32 %v784, %v900
      %v902 = vpop.f32.mrf.mxu0
      %v903 = vpop.f32.mrf.mxu0
      %v904 = vadd.f32 %v784, %v903
      %v905 = vpop.f32.mrf.mxu0
      %906 = vmatprep.mubr.bf16.mxu0 0
      %907 = vmatmul.mubr.bf16.gmra.mxu0 %v760
      %v908 = vpop.f32.mrf.mxu0
      %v909 = vadd.f32 %v784, %v908
      %v910 = vpop.f32.mrf.mxu0
      %v911 = vpop.f32.mrf.mxu0
      %v912 = vadd.f32 %v784, %v911
      %v913 = vpop.f32.mrf.mxu0
      %914 = vmatprep.mubr.bf16.mxu0 0
      %915 = vmatmul.mubr.bf16.gmra.mxu0 %v761
      %v916 = vpop.f32.mrf.mxu0
      %v917 = vadd.f32 %v784, %v916
      %v918 = vpop.f32.mrf.mxu0
      %v919 = vpop.f32.mrf.mxu0
      %v920 = vadd.f32 %v784, %v919
      %v921 = vpop.f32.mrf.mxu0
      %922 = vmatprep.mubr.bf16.mxu0 0
      %923 = vmatmul.mubr.bf16.gmra.mxu0 %v762
      %v924 = vpop.f32.mrf.mxu0
      %v925 = vadd.f32 %v784, %v924
      %v926 = vpop.f32.mrf.mxu0
      %v927 = vpop.f32.mrf.mxu0
      %v928 = vadd.f32 %v784, %v927
      %v929 = vpop.f32.mrf.mxu0
      %930 = vdwg.mxu0
      %931 = vst [vmem:[%s280] sm:$0xff] %v869
      %932 = vst [vmem:[%s280 + $0x8] sm:$0xff] %v872
      %933 = vst [vmem:[%s280 + $0x10] sm:$0xff] %v877
      %934 = vst [vmem:[%s280 + $0x18] sm:$0xff] %v880
      %935 = vst [vmem:[%s280 + $0x20] sm:$0xff] %v885
      %936 = vst [vmem:[%s280 + $0x28] sm:$0xff] %v888
      %937 = vst [vmem:[%s280 + $0x30] sm:$0xff] %v893
      %938 = vst [vmem:[%s280 + $0x38] sm:$0xff] %v896
      %939 = vst [vmem:[%s280 + $0x40] sm:$0xff] %v901
      %940 = vst [vmem:[%s280 + $0x48] sm:$0xff] %v904
      %941 = vst [vmem:[%s280 + $0x50] sm:$0xff] %v909
      %942 = vst [vmem:[%s280 + $0x58] sm:$0xff] %v912
      %943 = vst [vmem:[%s280 + $0x60] sm:$0xff] %v917
      %944 = vst [vmem:[%s280 + $0x68] sm:$0xff] %v920
      %945 = vst [vmem:[%s280 + $0x70] sm:$0xff] %v925
      %946 = vst [vmem:[%s280 + $0x78] sm:$0xff] %v928
      %s947 = smul.u32 16, %s18
      %p948 = scmp.lt.s32.totalorder %s947, 31
      %s949 = scalar_select %p948, %s947, 31
      %s950 = smul.addr %s949, 8
      %s951 = scalar_lea.vmem %s7, %s950
      // Predicated region
      $region49: #{forward.1} parent=47 // pred_check
        %p952 = pneg %p188
      $region50: #{forward.1} parent=47 // pred_check_branch
        %954 = sbr.rel (%p952) target = $region52
      $region51: #{forward.1} parent=47 // pred_region
        %s955 = smul.u32 16, %s18
      $region52: #{forward.1} parent=47 // pred_fallthru
        _
    $region48: #{forward.1} parent=5 // pred_fallthru
      _
    %p956 = scmp.le.s32.totalorder 2, %s13
    // Predicated region
    $region53: #{forward.1} parent=5 // pred_check
      %p957 = pneg %p956
    $region54: #{forward.1} parent=5 // pred_check_branch
      %959 = sbr.rel (%p957) target = $region56
    $region55: #{forward.1} parent=5 // pred_region
      %s960 = ssub.s32 %s13, 2
      // Predicated region
      $region57: #{forward.1} parent=55 // pred_check
        %p961 = pneg %p194
      $region58: #{forward.1} parent=55 // pred_check_branch
        %963 = sbr.rel (%p961) target = $region60
      $region59: #{forward.1} parent=55 // pred_region
        %s964 = smul.u32 16, %s19
        %p965 = scmp.lt.s32.totalorder %s964, 31
        %s966 = scalar_select %p965, %s964, 31
        %s967 = smul.addr %s966, 8
        %s968 = scalar_lea.vmem %s7, %s967
      $region60: #{forward.1} parent=55 // pred_fallthru
        _
    $region56: #{forward.1} parent=5 // pred_fallthru
      _
  $region6: #{forward.1} parent=0 // loop_footer
    %s17 = sadd.s32 1, %s13
  $region7: #{forward.1} parent=0 // loop_footer_branch
    %12 = sbr.rel target = $region3
  $region8: #{forward.1} parent=0 // loop_exit
    _

</llo_original>
